<compile_context>
chip_gen: v6e
topology: v6e:2x2x1
jax: 0.10.0
libtpu: 0.0.40
codegen_flags: <defaults>
</compile_context>

<pallas_src>
import functools

import jax
import jax.numpy as jnp
from jax.experimental import pallas as pl
from jax.experimental.pallas import tpu as pltpu


def _focal_loss_kernel(*refs, gamma: float, has_alpha: bool):
    if has_alpha:
        logits_ref, targets_ref, alpha_t_ref, out_ref = refs
    else:
        logits_ref, targets_ref, out_ref = refs
        alpha_t_ref = None

    raw = logits_ref[...]                                    # (TB, C), input dtype
    tgt = targets_ref[...]                                   # (TB, 1), int32
    TB, C = raw.shape

    # Row max in the input dtype (exact for bf16), then f32 for everything else.
    m = jnp.max(raw, axis=-1, keepdims=True).astype(jnp.float32)   # (TB, 1)
    shifted = raw - m                                        # implicit upcast -> f32
    sumexp = jnp.sum(jnp.exp(shifted), axis=-1, keepdims=True)      # (TB, 1)

    # Target (shifted) logit via a masked lane reduce — no f32 one-hot tile.
    col = jax.lax.broadcasted_iota(jnp.int32, (TB, C), 1)
    tgt_shifted = jnp.sum(jnp.where(col == tgt, shifted, 0.0),
                          axis=-1, keepdims=True)            # (TB, 1)

    # ce = lse - target_logit = (m + log(sumexp)) - (tgt_shifted + m)
    ce = jnp.log(sumexp) - tgt_shifted                       # (TB, 1), >= 0
    p_t = jnp.exp(-ce)
    x = jnp.maximum(1.0 - p_t, 0.0)

    # focal factor: integer gamma -> repeated multiply (no exp/log pair)
    g = float(gamma)
    gi = int(round(g))
    if abs(g - gi) < 1e-12 and 0 <= gi <= 16:
        focal = jnp.ones_like(x) if gi == 0 else x
        for _ in range(max(gi - 1, 0)):
            focal = focal * x
    else:
        focal = jnp.power(x, g)

    loss = focal * ce                                        # (TB, 1)
    if has_alpha:
        loss = alpha_t_ref[...] * loss                       # alpha_t pre-gathered

    # Lane-dense store: one row of TB losses per grid step.
    out_ref[...] = loss.reshape(1, TB).astype(out_ref.dtype)


def _choose_tile_b(B: int, C: int, itemsize: int) -> int:
    """Rows per grid step.

    Sized so that (2 pipelined input-dtype copies + ~4 f32 full-tile
    intermediates) stays within ~40 MiB of VMEM (safe for v7x's 64 MiB),
    while targeting ~8 MiB of input-dtype tile bytes for HBM streaming,
    and keeping >= 2 grid steps when B >= 16 (v7x megacore).
    """
    if B <= 8:
        return B                           # block equals full dim -> always legal
    vmem_budget = 40 * 1024 * 1024
    per_row = C * (2 * itemsize + 4 * 4)   # 2 input buffers + ~4 f32 temporaries
    tb = vmem_budget // max(1, per_row)
    tb = min(tb, (8 * 1024 * 1024) // max(1, itemsize * C))  # ~8 MiB input tile
    if B >= 16:
        tb = min(tb, (B + 1) // 2)         # guarantee >= 2 grid steps (2 TCs on v7x)
    tb = min(tb, B)
    return max(8, (int(tb) // 8) * 8)


def _vmem_limit_bytes() -> int:
    """Chip-aware scoped-VMEM limit: ~48 MiB on 64-MiB parts, ~96 MiB on 128-MiB."""
    cap = 64 * 1024 * 1024                 # conservative fallback (v7x per-core)
    try:
        cap = int(pltpu.get_tpu_info().vmem_capacity_bytes)
    except Exception:
        pass
    return min(96 * 1024 * 1024, (3 * cap) // 4)


def focal_loss(logits, targets, alpha=None, *, gamma: float = 2.0,
               reduction: str = "mean"):
    """logits: (B, C) float (f32 or bf16), targets: (B,) int, alpha: (C,) or None."""
    B, C = logits.shape
    targets = targets.astype(jnp.int32)
    has_alpha = alpha is not None

    # Pad classes to a lane-dense multiple of 128 with -inf (no copy if aligned).
    c_pad = ((C + 127) // 128) * 128
    if c_pad != C:
        logits = jnp.pad(logits, ((0, 0), (0, c_pad - C)),
                         constant_values=-jnp.inf)

    targets2d = targets.reshape(B, 1)
    tb = _choose_tile_b(B, c_pad, jnp.dtype(logits.dtype).itemsize)
    grid_b = pl.cdiv(B, tb)

    in_specs = [
        pl.BlockSpec((tb, c_pad), lambda i: (i, 0)),   # streamed logits tile
        pl.BlockSpec((tb, 1), lambda i: (i, 0)),       # targets
    ]
    args = [logits, targets2d]
    if has_alpha:
        # Gather alpha per-sample in the wrapper: removes a full-(TB,C) multiply
        # + lane reduce from the kernel for only +4 bytes/row of HBM traffic.
        alpha_t = alpha.astype(jnp.float32)[targets].reshape(B, 1)
        in_specs.append(pl.BlockSpec((tb, 1), lambda i: (i, 0)))
        args.append(alpha_t)

    kernel = functools.partial(_focal_loss_kernel, gamma=float(gamma),
                               has_alpha=has_alpha)

    out = pl.pallas_call(
        kernel,
        out_shape=jax.ShapeDtypeStruct((grid_b, tb), jnp.float32),
        grid=(grid_b,),
        in_specs=in_specs,
        # Lane-dense output: one (1, tb) row per grid step.
        out_specs=pl.BlockSpec((1, tb), lambda i: (i, 0)),
        compiler_params=pltpu.CompilerParams(
            dimension_semantics=("parallel",),
            vmem_limit_bytes=_vmem_limit_bytes(),
        ),
    )(*args)

    # Tail rows beyond B (when B % tb != 0) computed on undefined data; they are
    # discarded here, never accumulated in-kernel.
    loss = out.reshape(-1)[:B]                      # (B,) per-sample losses
    if reduction == "mean":
        return loss.mean()
    if reduction == "sum":
        return loss.sum()
    return loss


def _focal_loss_ref(logits, targets, alpha, gamma, reduction):
    """Pure-JAX reference mirroring the PyTorch forward."""
    logp = jax.nn.log_softmax(logits.astype(jnp.float32), axis=-1)
    ce = -jnp.take_along_axis(logp, targets[:, None].astype(jnp.int32), axis=-1)[:, 0]
    p_t = jnp.exp(-ce)
    focal = (1.0 - p_t) ** gamma
    alpha_t = alpha[targets].astype(jnp.float32) if alpha is not None else 1.0
    loss = alpha_t * focal * ce
    if reduction == "mean":
        return loss.mean()
    if reduction == "sum":
        return loss.sum()
    return loss


if __name__ == "__main__":
    key = jax.random.PRNGKey(0)
    k1, k2, k3, k4 = jax.random.split(key, 4)

    B, C = 8, 16
    gamma = 2.0

    logits = jax.random.normal(k1, (B, C), dtype=jnp.float32) * 3.0
    targets = jax.random.randint(k2, (B,), 0, C, dtype=jnp.int32)
    alpha = jnp.linspace(0.25, 1.0, C, dtype=jnp.float32)

    # mean reduction with alpha
    out = jax.block_until_ready(
        focal_loss(logits, targets, alpha, gamma=gamma, reduction="mean"))
    ref = _focal_loss_ref(logits, targets, alpha, gamma, "mean")
    assert jnp.allclose(out, ref, rtol=1e-5, atol=1e-5), (out, ref)

    # 'none' (per-sample) path
    out_none = jax.block_until_ready(
        focal_loss(logits, targets, alpha, gamma=gamma, reduction="none"))
    ref_none = _focal_loss_ref(logits, targets, alpha, gamma, "none")
    assert jnp.allclose(out_none, ref_none, rtol=1e-5, atol=1e-5)

    # alpha=None specialization, 'sum' reduction
    out_sum = jax.block_until_ready(
        focal_loss(logits, targets, None, gamma=gamma, reduction="sum"))
    ref_sum = _focal_loss_ref(logits, targets, None, gamma, "sum")
    assert jnp.allclose(out_sum, ref_sum, rtol=1e-5, atol=1e-5)

    # bf16 logits streamed straight through (kernel upcasts in-register)
    logits_bf16 = logits.astype(jnp.bfloat16)
    out_bf16 = jax.block_until_ready(
        focal_loss(logits_bf16, targets, alpha, gamma=gamma, reduction="mean"))
    ref_bf16 = _focal_loss_ref(logits_bf16, targets, alpha, gamma, "mean")
    assert jnp.allclose(out_bf16, ref_bf16, rtol=1e-3, atol=1e-3)

    # Multi-step grid + partial tail tile (exercises >=2 grid steps, lane-dense
    # (grid, tb) output path, and tail-row discard).
    B2, C2 = 50, 128
    logits2 = jax.random.normal(k3, (B2, C2), dtype=jnp.bfloat16)
    targets2 = jax.random.randint(k4, (B2,), 0, C2, dtype=jnp.int32)
    out2 = jax.block_until_ready(
        focal_loss(logits2, targets2, None, gamma=gamma, reduction="none"))
    ref2 = _focal_loss_ref(logits2, targets2, None, gamma, "none")
    assert jnp.allclose(out2, ref2, rtol=2e-3, atol=2e-3)

    print("KERNEL_OK")
</pallas_src>

<mosaic_0001>
module attributes {stable_mosaic.version = 11 : i64} {
  func.func @_focal_loss_kernel(%arg0: i32, %arg1: memref<8x128xf32, #tpu.memory_space<vmem>>, %arg2: memref<8x1xi32, #tpu.memory_space<vmem>>, %arg3: memref<8x1xf32, #tpu.memory_space<vmem>>, %arg4: memref<1x8xf32, #tpu.memory_space<vmem>>) attributes {dimension_semantics = [#tpu.dimension_semantics<parallel>], iteration_bounds = array<i64: 1>, scalar_prefetch = 0 : i64, scratch_operands = 0 : i64, tpu.core_type = #tpu.core_type<tc>, window_params = [{transform_indices = @transform_0, window_bounds = array<i64: 8, 128>}, {transform_indices = @transform_1, window_bounds = array<i64: 8, 1>}, {transform_indices = @transform_2, window_bounds = array<i64: 8, 1>}, {transform_indices = @transform_3, window_bounds = array<i64: 1, 8>}]} {
    %c0 = arith.constant 0 : index
    %c0_0 = arith.constant 0 : index
    %0 = vector.load %arg1[%c0, %c0_0] : memref<8x128xf32, #tpu.memory_space<vmem>>, vector<8x128xf32>
    %c0_1 = arith.constant 0 : index
    %c0_2 = arith.constant 0 : index
    %1 = vector.load %arg2[%c0_1, %c0_2] : memref<8x1xi32, #tpu.memory_space<vmem>>, vector<8x1xi32>
    %cst = arith.constant dense<0xFF800000> : vector<8xf32>
    %2 = vector.multi_reduction <maximumf>, %0, %cst [1] : vector<8x128xf32> to vector<8xf32>
    %3 = vector.shape_cast %2 : vector<8xf32> to vector<8x1xf32>
    %4 = vector.broadcast %3 : vector<8x1xf32> to vector<8x128xf32>
    %5 = arith.subf %0, %4 : vector<8x128xf32>
    %6 = math.exp %5 : vector<8x128xf32>
    %cst_3 = arith.constant dense<0.000000e+00> : vector<8xf32>
    %7 = vector.multi_reduction <add>, %6, %cst_3 [1] : vector<8x128xf32> to vector<8xf32>
    %8 = vector.shape_cast %7 : vector<8xf32> to vector<8x1xf32>
    %9 = tpu.iota {dimensions = array<i32: 1>} : vector<8x128xi32>
    %10 = vector.broadcast %1 : vector<8x1xi32> to vector<8x128xi32>
    %11 = arith.cmpi eq, %9, %10 : vector<8x128xi32>
    %cst_4 = arith.constant 0.000000e+00 : f32
    %12 = vector.broadcast %cst_4 : f32 to vector<8x128xf32>
    %13 = arith.select %11, %5, %12 : vector<8x128xi1>, vector<8x128xf32>
    %cst_5 = arith.constant dense<0.000000e+00> : vector<8xf32>
    %14 = vector.multi_reduction <add>, %13, %cst_5 [1] : vector<8x128xf32> to vector<8xf32>
    %15 = vector.shape_cast %14 : vector<8xf32> to vector<8x1xf32>
    %16 = math.log %8 : vector<8x1xf32>
    %17 = arith.subf %16, %15 : vector<8x1xf32>
    %cst_6 = arith.constant 0.000000e+00 : f32
    %18 = vector.broadcast %cst_6 : f32 to vector<8x1xf32>
    %19 = arith.subf %18, %17 : vector<8x1xf32>
    %20 = math.exp %19 : vector<8x1xf32>
    %cst_7 = arith.constant 1.000000e+00 : f32
    %21 = vector.broadcast %cst_7 : f32 to vector<8x1xf32>
    %22 = arith.subf %21, %20 : vector<8x1xf32>
    %cst_8 = arith.constant 0.000000e+00 : f32
    %23 = vector.broadcast %cst_8 : f32 to vector<8x1xf32>
    %24 = arith.maximumf %22, %23 : vector<8x1xf32>
    %25 = arith.mulf %24, %24 : vector<8x1xf32>
    %26 = arith.mulf %25, %17 : vector<8x1xf32>
    %c0_9 = arith.constant 0 : index
    %c0_10 = arith.constant 0 : index
    %27 = vector.load %arg3[%c0_9, %c0_10] : memref<8x1xf32, #tpu.memory_space<vmem>>, vector<8x1xf32>
    %28 = arith.mulf %27, %26 : vector<8x1xf32>
    %29 = vector.shape_cast %28 : vector<8x1xf32> to vector<1x8xf32>
    %c0_11 = arith.constant 0 : index
    %c0_12 = arith.constant 0 : index
    %30 = vector.load %arg4[%c0_11, %c0_12] : memref<1x8xf32, #tpu.memory_space<vmem>>, vector<1x8xf32>
    tpu.vector_store %arg4[%c0_11, %c0_12], %29 {strides = array<i32>} : memref<1x8xf32, #tpu.memory_space<vmem>>, vector<1x8xf32>,
    return
  }
  func.func @transform_0(%arg0: i32) -> (i32, i32) {
    %c0_i32 = arith.constant 0 : i32
    %c0_i32_0 = arith.constant 0 : i32
    return %arg0, %c0_i32 : i32, i32
  }
  func.func @transform_1(%arg0: i32) -> (i32, i32) {
    %c0_i32 = arith.constant 0 : i32
    %c0_i32_0 = arith.constant 0 : i32
    return %arg0, %c0_i32 : i32, i32
  }
  func.func @transform_2(%arg0: i32) -> (i32, i32) {
    %c0_i32 = arith.constant 0 : i32
    %c0_i32_0 = arith.constant 0 : i32
    return %arg0, %c0_i32 : i32, i32
  }
  func.func @transform_3(%arg0: i32) -> (i32, i32) {
    %c0_i32 = arith.constant 0 : i32
    %c0_i32_0 = arith.constant 0 : i32
    return %arg0, %c0_i32 : i32, i32
  }
}

</mosaic_0001>

<llo_original>
// kernel: tpu_custom_call.1
$region0: #{tpu_custom_call.1}
  #allocation0 [shape = 'u32[]', space=smem, size = 0x4, offset = 0x4, fixed_abs, tag = 'smem constant byte address 0x4 - core index']
  #allocation1 [shape = 'u32[144,128]{1,0:T(1,128)}', space=vmem, size = 0x12000, scoped, tag = 'internal scratch']
  %s0 = inlined_call_operand.vmem [shape: f32[8,128], index: 0, kind: input, shape index: {}]
  %s1 = inlined_call_operand.vmem [shape: s32[8,1], index: 1, kind: input, shape index: {}]
  %s2 = inlined_call_operand.vmem [shape: f32[8,1], index: 2, kind: input, shape index: {}]
  %s3 = inlined_call_operand.hbm [shape: f32[1,8], index: 3, kind: output, shape index: {}]
  %s4 = sld [smem:[#allocation0]]
  $region22: #{tpu_custom_call.1} parent=0
    _
  %s6 = ssub.s32 1, %s4
  %s7 = scalar_select 0, %s6, %s4
  $region1: #{tpu_custom_call.1} parent=0
    #allocation2 [shape = 'u8[512]{0}', space=vmem, size = 0x400, scoped, tag = 'output window, operand 0, single buffered']
    #allocation3 [shape = 's32[1]{0}', space=sflag, size = 0x4, scoped, tag = 'scoped memory for tpu_custom_call.1']
    %8 = vsyncpa [#allocation3], 0
    // Predicated region
    $region2: #{tpu_custom_call.1} parent=1 // pred_check
      _
    $region3: #{tpu_custom_call.1} parent=1 // pred_check_branch
      %10 = sbr.rel (0) target = $region5
    $region4: #{tpu_custom_call.1} parent=1 // pred_region
      _
    $region5: #{tpu_custom_call.1} parent=1 // pred_fallthru
      _
    // Predicated region
    $region6: #{tpu_custom_call.1} parent=1 // pred_check
      _
    $region7: #{tpu_custom_call.1} parent=1 // pred_check_branch
      %12 = sbr.rel (0) target = $region9
    $region8: #{tpu_custom_call.1} parent=1 // pred_region
      _
    $region9: #{tpu_custom_call.1} parent=1 // pred_fallthru
      _
    // Predicated region
    $region10: #{tpu_custom_call.1} parent=1 // pred_check
      _
    $region11: #{tpu_custom_call.1} parent=1 // pred_check_branch
      %14 = sbr.rel (0) target = $region13
    $region12: #{tpu_custom_call.1} parent=1 // pred_region
      _
    $region13: #{tpu_custom_call.1} parent=1 // pred_fallthru
      _
    %v15 = vld [vmem:[%s0] sm:$0xff]
    %v16 = vld [vmem:[%s1] sm:$0xff]
    %17 = vmax.xlane.f32.xlu0 %v15
    %v18 = vpop.xlane.xlu0 %17
    %v19 = vsub.f32 %v15, %v18
    %v20 = vmul.f32 %v19, 1.442695
    %v21 = vpow.pop %v20
    %22 = vadd.xlane.f32.xlu0 %v21
    %v23 = vpop.xlane.xlu0 %22
    %v24 = vlaneseq
    %v25 = vand.u32 %v24, 127
    %26 = vset.pattern.permute.xlu0 0
    %27 = vperm.xlu0 %26, %v16
    %v28 = vpop.permute.xlu0 %27
    %vm29 = vcmp.eq.s32.totalorder %v25, %v28
    %v30 = vsel %vm29, %v19, 0.0
    %31 = vadd.xlane.f32.xlu0 %v30
    %v32 = vpop.xlane.xlu0 %31
    %v33 = vlog2.pop %v23
    %v34 = vmul.f32 %v33, 0.6931472
    %v35 = vsub.f32 %v34, %v32
    %v36 = vsub.f32 0.0, %v35
    %v37 = vmul.f32 %v36, 1.442695
    %v38 = vpow.pop %v37
    %v39 = vsub.f32 1.0, %v38
    %v40 = vmax.f32 %v39, 0.0
    %v41 = vmul.f32 %v40, %v40
    %v42 = vmul.f32 %v41, %v35
    %v43 = vld [vmem:[%s2] sm:$0xff]
    %v44 = vmul.f32 %v43, %v42
    %46 = vset.pattern.permute.xlu0 0
    %47 = vperm.xlu0 %46, %v44
    %v48 = vpop.permute.xlu0 %47
    %v49 = vlaneseq
    %v50 = vshrl.u32 %v49, 7
    %v51 = vsub.s32 %v25, %v50
    %v52 = vrot.slane %v48, %v51
    %vm54 = vcmask 57344
    %55 = vst.msk [vmem:[#allocation2] sm:$0x1] %vm54, %v52
    // Predicated region
    $region14: #{tpu_custom_call.1} parent=1 // pred_check
      _
    $region15: #{tpu_custom_call.1} parent=1 // pred_check_branch
      %57 = sbr.rel (0) target = $region17
    $region16: #{tpu_custom_call.1} parent=1 // pred_region
      %s59 = ssub.s32 16, 16
      %60 = vsyncadd [#allocation3], %s59
      %s62 = sshll.u32 [#allocation2], 4
      %s63 = int_to_ptr.vmem [resolvable:$true] %s62
      %65 = dma.vmem_to_hbm [thread:$0]  %s63, 16, %s3, [#allocation3]
    $region17: #{tpu_custom_call.1} parent=1 // pred_fallthru
      _
    // Predicated region
    $region18: #{tpu_custom_call.1} parent=1 // pred_check
      _
    $region19: #{tpu_custom_call.1} parent=1 // pred_check_branch
      %67 = sbr.rel (0) target = $region21
    $region20: #{tpu_custom_call.1} parent=1 // pred_region
      %68 = dma.done [#allocation3], 16
    $region21: #{tpu_custom_call.1} parent=1 // pred_fallthru
      _
    %69 = vsyncpa [#allocation3], 1

</llo_original>
